<compile_context>
chip_gen: v5e
topology: v5e:2x2
jax: 0.10.0
libtpu: 0.0.40
codegen_flags: <defaults>
</compile_context>

<pallas_src>
import functools

import jax
import jax.numpy as jnp
from jax import lax
from jax.experimental import pallas as pl
from jax.experimental.pallas import tpu as pltpu


def _round_up(x, m):
    return (x + m - 1) // m * m


# ---------------------------------------------------------------------------
# Pass 1: tiled conv-as-matmul (bf16 in, f32 acc) + per-tile channel stats.
#   a_ref : (TILE_M, K_pad)      bf16   im2col rows for this tile
#   w_ref : (K_pad, COUT_pad)    bf16   flattened conv weight (resident)
#   y_ref : (TILE_M, COUT_pad)   f32    conv output tile
#   stats : (8, COUT_pad)        f32    row0 = sum, row1 = sum of squares
# ---------------------------------------------------------------------------
def _matmul_stats_kernel(a_ref, w_ref, y_ref, stats_ref):
    y = jnp.dot(a_ref[...], w_ref[...], preferred_element_type=jnp.float32)
    y_ref[...] = y
    cp = y.shape[1]
    s = jnp.sum(y, axis=0, keepdims=True)          # (1, COUT_pad)
    sq = jnp.sum(y * y, axis=0, keepdims=True)     # (1, COUT_pad)
    stats_ref[...] = jnp.concatenate(
        [s, sq, jnp.zeros((6, cp), jnp.float32)], axis=0)


# ---------------------------------------------------------------------------
# Pass 2: per-channel affine (BN scale/shift or conv bias) + ReLU.
# ---------------------------------------------------------------------------
def _affine_relu_kernel(y_ref, scale_ref, shift_ref, o_ref):
    o_ref[...] = jnp.maximum(
        y_ref[...] * scale_ref[...] + shift_ref[...], 0.0).astype(o_ref.dtype)


def convolution_forward(x_nchw, weight_oihw, gamma, beta, bias,
                        *, stride=1, with_bn=True, eps=1e-5, tile_m=256):
    """Forward pass of the PyTorch `Convolution` module (NCHW in/out)."""
    n, cin, h, w = x_nchw.shape
    cout, _, kh, kw = weight_oihw.shape
    pad = (kh - 1) // 2
    out_h = (h + 2 * pad - kh) // stride + 1
    out_w = (w + 2 * pad - kw) // stride + 1
    rows = n * out_h * out_w
    k_dim = kh * kw * cin

    # MXU / lane friendly padded sizes.
    cout_p = _round_up(cout, 128)
    k_p = _round_up(k_dim, 128)
    rows_p = _round_up(rows, tile_m)
    num_tiles = rows_p // tile_m

    # ---- glue (XLA): NCHW->NHWC, spatial pad, im2col, pad, cast bf16 -------
    x_nhwc = jnp.transpose(x_nchw, (0, 2, 3, 1))
    xp = jnp.pad(x_nhwc, ((0, 0), (pad, pad), (pad, pad), (0, 0)))
    taps = []
    for ih in range(kh):
        for iw in range(kw):
            taps.append(lax.slice(
                xp, (0, ih, iw, 0),
                (n, ih + (out_h - 1) * stride + 1,
                 iw + (out_w - 1) * stride + 1, cin),
                (1, stride, stride, 1)))
    patches = jnp.concatenate(taps, axis=-1)          # (N, Ho, Wo, KH*KW*Cin)
    a = patches.reshape(rows, k_dim)
    a = jnp.pad(a, ((0, rows_p - rows), (0, k_p - k_dim))).astype(jnp.bfloat16)

    w_mat = jnp.transpose(weight_oihw, (2, 3, 1, 0)).reshape(k_dim, cout)
    w_mat = jnp.pad(
        w_mat, ((0, k_p - k_dim), (0, cout_p - cout))).astype(jnp.bfloat16)

    # ---- pass 1: conv matmul + per-tile per-channel sum / sum-of-squares ---
    # TODO(synk): for very large Cin*KH*KW, tile the K contraction with an
    # 'arbitrary' grid axis and a VMEM accumulator instead of one resident
    # (K_pad, COUT_pad) weight tile.
    y_conv, stats = pl.pallas_call(
        _matmul_stats_kernel,
        out_shape=(jax.ShapeDtypeStruct((rows_p, cout_p), jnp.float32),
                   jax.ShapeDtypeStruct((num_tiles * 8, cout_p), jnp.float32)),
        grid=(num_tiles,),
        in_specs=[
            pl.BlockSpec((tile_m, k_p), lambda i: (i, 0)),
            pl.BlockSpec((k_p, cout_p), lambda i: (0, 0)),
        ],
        out_specs=(
            pl.BlockSpec((tile_m, cout_p), lambda i: (i, 0)),
            pl.BlockSpec((8, cout_p), lambda i: (i, 0)),
        ),
        compiler_params=pltpu.CompilerParams(
            dimension_semantics=("parallel",)),
    )(a, w_mat)

    # ---- tiny per-channel finalize (Cout-sized) in plain JAX ---------------
    # Zero-padded rows/channels contribute 0 to sum & sumsq, so dividing by
    # the true `rows` count gives exact full-batch statistics.
    if with_bn:
        st = stats.reshape(num_tiles, 8, cout_p)
        col_sum = jnp.sum(st[:, 0, :], axis=0)
        col_sq = jnp.sum(st[:, 1, :], axis=0)
        mean = col_sum / rows
        # Biased variance over (N, H, W) = PyTorch training-mode BN.  f32
        # E[x^2]-E[x]^2 is adequate here; switch to a two-pass/Welford form
        # if activations grow very large.
        var = col_sq / rows - mean * mean
        gamma_p = jnp.pad(gamma.astype(jnp.float32), (0, cout_p - cout))
        beta_p = jnp.pad(beta.astype(jnp.float32), (0, cout_p - cout))
        scale = gamma_p * lax.rsqrt(var + eps)
        shift = beta_p - mean * scale
    else:
        scale = jnp.ones((cout_p,), jnp.float32)
        shift = jnp.pad(bias.astype(jnp.float32), (0, cout_p - cout))
    scale2 = scale.reshape(1, cout_p)
    shift2 = shift.reshape(1, cout_p)

    # ---- pass 2: y * scale + shift, ReLU (lane-dense tiled stores) ---------
    out2d = pl.pallas_call(
        _affine_relu_kernel,
        out_shape=jax.ShapeDtypeStruct((rows_p, cout_p), x_nchw.dtype),
        grid=(num_tiles,),
        in_specs=[
            pl.BlockSpec((tile_m, cout_p), lambda i: (i, 0)),
            pl.BlockSpec((1, cout_p), lambda i: (0, 0)),
            pl.BlockSpec((1, cout_p), lambda i: (0, 0)),
        ],
        out_specs=pl.BlockSpec((tile_m, cout_p), lambda i: (i, 0)),
        compiler_params=pltpu.CompilerParams(
            dimension_semantics=("parallel",)),
    )(y_conv, scale2, shift2)

    out_nhwc = out2d[:rows, :cout].reshape(n, out_h, out_w, cout)
    return jnp.transpose(out_nhwc, (0, 3, 1, 2))          # back to NCHW


def reference_forward(x, weight, gamma, beta, bias,
                      *, stride=1, with_bn=True, eps=1e-5):
    """Pure-JAX reference (same bf16-input / f32-accumulate precision)."""
    pad = (weight.shape[2] - 1) // 2
    y = lax.conv_general_dilated(
        x.astype(jnp.bfloat16), weight.astype(jnp.bfloat16),
        (stride, stride), [(pad, pad), (pad, pad)],
        dimension_numbers=("NCHW", "OIHW", "NCHW"),
        preferred_element_type=jnp.float32)
    if with_bn:
        mean = jnp.mean(y, axis=(0, 2, 3), keepdims=True)
        var = jnp.mean((y - mean) ** 2, axis=(0, 2, 3), keepdims=True)
        y = (y - mean) * lax.rsqrt(var + eps)
        y = y * gamma.reshape(1, -1, 1, 1) + beta.reshape(1, -1, 1, 1)
    else:
        y = y + bias.reshape(1, -1, 1, 1)
    return jnp.maximum(y, 0.0).astype(x.dtype)


if __name__ == "__main__":
    key = jax.random.PRNGKey(0)
    # (N, Cin, Cout, H, W, K, stride, with_bn)
    configs = [
        (2, 4, 8, 16, 16, 3, 1, True),
        (2, 4, 8, 16, 16, 3, 2, True),
        (2, 4, 8, 16, 16, 3, 1, False),
    ]
    for (n, cin, cout, h, w, k, s, with_bn) in configs:
        key, kx, kwt, kg, kb, kbi = jax.random.split(key, 6)
        x = jax.random.normal(kx, (n, cin, h, w), dtype=jnp.float32)
        fan_in = cin * k * k
        weight = jax.random.uniform(
            kwt, (cout, cin, k, k), jnp.float32,
            minval=-1.0 / jnp.sqrt(fan_in), maxval=1.0 / jnp.sqrt(fan_in))
        gamma = jax.random.uniform(kg, (cout,), jnp.float32, minval=0.5, maxval=1.5)
        beta = jax.random.uniform(kb, (cout,), jnp.float32, minval=-0.5, maxval=0.5)
        bias = jax.random.uniform(kbi, (cout,), jnp.float32, minval=-0.1, maxval=0.1)

        out = convolution_forward(x, weight, gamma, beta, bias,
                                  stride=s, with_bn=with_bn)
        out = jax.block_until_ready(out)
        ref = reference_forward(x, weight, gamma, beta, bias,
                                stride=s, with_bn=with_bn)

        pad = (k - 1) // 2
        oh = (h + 2 * pad - k) // s + 1
        ow = (w + 2 * pad - k) // s + 1
        assert out.shape == (n, cout, oh, ow), out.shape
        err = jnp.max(jnp.abs(out - ref))
        assert jnp.allclose(out, ref, atol=2e-3, rtol=2e-3), (
            f"config={(n, cin, cout, h, w, k, s, with_bn)} max abs err={err}")

    print("KERNEL_OK")
</pallas_src>

<mosaic_0001>
module attributes {stable_mosaic.version = 11 : i64} {
  func.func @_matmul_stats_kernel(%arg0: i32, %arg1: memref<256x128xbf16, #tpu.memory_space<vmem>>, %arg2: memref<128x128xbf16, #tpu.memory_space<vmem>>, %arg3: memref<256x128xf32, #tpu.memory_space<vmem>>, %arg4: memref<8x128xf32, #tpu.memory_space<vmem>>) attributes {dimension_semantics = [#tpu.dimension_semantics<parallel>], iteration_bounds = array<i64: 2>, scalar_prefetch = 0 : i64, scratch_operands = 0 : i64, tpu.core_type = #tpu.core_type<tc>, window_params = [{transform_indices = @transform_0, window_bounds = array<i64: 256, 128>}, {pipeline_mode = #tpu.pipeline_mode<synchronous>, transform_indices = @transform_1, window_bounds = array<i64: 128, 128>}, {transform_indices = @transform_2, window_bounds = array<i64: 256, 128>}, {transform_indices = @transform_3, window_bounds = array<i64: 8, 128>}]} {
    %c0 = arith.constant 0 : index
    %c0_0 = arith.constant 0 : index
    %0 = vector.load %arg1[%c0, %c0_0] : memref<256x128xbf16, #tpu.memory_space<vmem>>, vector<256x128xbf16>
    %c0_1 = arith.constant 0 : index
    %c0_2 = arith.constant 0 : index
    %1 = vector.load %arg2[%c0_1, %c0_2] : memref<128x128xbf16, #tpu.memory_space<vmem>>, vector<128x128xbf16>
    %cst = arith.constant dense<0.000000e+00> : vector<256x128xf32>
    %2 = tpu.matmul %0, %1, %cst {dimension_numbers = #tpu.dot_dimension_numbers<[1], [0], [0], [1], [0, 0, 1, 1], [], []>} : vector<256x128xbf16>, vector<128x128xbf16>, vector<256x128xf32> -> vector<256x128xf32>
    %c0_3 = arith.constant 0 : index
    %c0_4 = arith.constant 0 : index
    %3 = vector.load %arg3[%c0_3, %c0_4] : memref<256x128xf32, #tpu.memory_space<vmem>>, vector<256x128xf32>
    tpu.vector_store %arg3[%c0_3, %c0_4], %2 {strides = array<i32>} : memref<256x128xf32, #tpu.memory_space<vmem>>, vector<256x128xf32>,
    %cst_5 = arith.constant dense<0.000000e+00> : vector<128xf32>
    %4 = vector.multi_reduction <add>, %2, %cst_5 [0] : vector<256x128xf32> to vector<128xf32>
    %5 = vector.shape_cast %4 : vector<128xf32> to vector<1x128xf32>
    %6 = arith.mulf %2, %2 : vector<256x128xf32>
    %cst_6 = arith.constant dense<0.000000e+00> : vector<128xf32>
    %7 = vector.multi_reduction <add>, %6, %cst_6 [0] : vector<256x128xf32> to vector<128xf32>
    %8 = vector.shape_cast %7 : vector<128xf32> to vector<1x128xf32>
    %cst_7 = arith.constant 0.000000e+00 : f32
    %9 = vector.broadcast %cst_7 : f32 to vector<6x128xf32>
    %10 = tpu.concatenate %5, %8, %9 in 0 : vector<1x128xf32>, vector<1x128xf32>, vector<6x128xf32> -> vector<8x128xf32>
    %c0_8 = arith.constant 0 : index
    %c0_9 = arith.constant 0 : index
    %11 = vector.load %arg4[%c0_8, %c0_9] : memref<8x128xf32, #tpu.memory_space<vmem>>, vector<8x128xf32>
    tpu.vector_store %arg4[%c0_8, %c0_9], %10 {strides = array<i32>} : memref<8x128xf32, #tpu.memory_space<vmem>>, vector<8x128xf32>,
    return
  }
  func.func @transform_0(%arg0: i32) -> (i32, i32) {
    %c0_i32 = arith.constant 0 : i32
    %c0_i32_0 = arith.constant 0 : i32
    return %arg0, %c0_i32 : i32, i32
  }
  func.func @transform_1(%arg0: i32) -> (i32, i32) {
    %c0_i32 = arith.constant 0 : i32
    %c0_i32_0 = arith.constant 0 : i32
    %c0_i32_1 = arith.constant 0 : i32
    return %c0_i32, %c0_i32_0 : i32, i32
  }
  func.func @transform_2(%arg0: i32) -> (i32, i32) {
    %c0_i32 = arith.constant 0 : i32
    %c0_i32_0 = arith.constant 0 : i32
    return %arg0, %c0_i32 : i32, i32
  }
  func.func @transform_3(%arg0: i32) -> (i32, i32) {
    %c0_i32 = arith.constant 0 : i32
    %c0_i32_0 = arith.constant 0 : i32
    return %arg0, %c0_i32 : i32, i32
  }
}

</mosaic_0001>

<llo_original>
// kernel: tpu_custom_call.1
$region0: #{tpu_custom_call.1}
  #allocation0 [shape = 'u32[]', space=smem, size = 0x4, offset = 0x4, fixed_abs, tag = 'smem constant byte address 0x4 - core index']
  #allocation1 [shape = 'u32[72,128]{1,0:T(1,128)}', space=vmem, size = 0x9000, scoped, tag = 'internal scratch']
  %s0 = inlined_call_operand.hbm [shape: bf16[512,128], index: 0, kind: input, shape index: {}]
  %s1 = inlined_call_operand.hbm [shape: bf16[128,128], index: 1, kind: input, shape index: {}]
  %s2 = inlined_call_operand.hbm [shape: f32[512,128], index: 2, kind: output, shape index: {0}]
  %s3 = inlined_call_operand.hbm [shape: f32[16,128], index: 3, kind: output, shape index: {1}]
  %4 = xla_tuple %s2, %s3
  %s5 = sld [smem:[#allocation0]]
  $region57: #{tpu_custom_call.1} parent=0
    _
  %s7 = ssub.s32 1, %s5
  %s8 = scalar_select 0, %s7, %s5
  $region1: #{tpu_custom_call.1} parent=0
    #allocation2 [shape = 'u8[131072]{0}', space=vmem, size = 0x20000, scoped, tag = 'input window, operand 0']
    #allocation3 [shape = 's32[2]{0}', space=sflag, size = 0x8, scoped, tag = 'scoped memory for tpu_custom_call.1']
    #allocation4 [shape = 's32[2]{0}', space=sflag, size = 0x8, scoped, tag = 'scoped memory for tpu_custom_call.1']
    #allocation5 [shape = 'u8[32768]{0}', space=vmem, size = 0x8000, scoped, tag = 'input window, operand 1, single buffered']
    #allocation6 [shape = 's32[1]{0}', space=sflag, size = 0x4, scoped, tag = 'scoped memory for tpu_custom_call.1']
    #allocation7 [shape = 'u8[262144]{0}', space=vmem, size = 0x40000, scoped, tag = 'output window, operand 0']
    #allocation8 [shape = 'u8[8192]{0}', space=vmem, size = 0x2000, scoped, tag = 'output window, operand 1']
    #allocation9 [shape = 's32[2]{0}', space=sflag, size = 0x8, scoped, tag = 'scoped memory for tpu_custom_call.1']
    %9 = vsyncpa [#allocation3], 0
    %s10 = scalar_lea.sflag [#allocation3], 1
    %11 = vsyncpa %s10, 0
    %12 = vsyncpa [#allocation6], 0
    %13 = vsyncpa [#allocation4], 0
    %s14 = scalar_lea.sflag [#allocation4], 1
    %15 = vsyncpa %s14, 0
    %16 = vsyncpa [#allocation9], 0
    %s17 = scalar_lea.sflag [#allocation9], 1
    %18 = vsyncpa %s17, 0
    loop: start=0, step=1, limit=4
    $region2: #{tpu_custom_call.1} parent=1 // loop_pre_header
      _
    $region3: #{tpu_custom_call.1} parent=1 // loop_header
      %s20 = sphi 0, %s24
      %p21 = scmp.ge.s32.totalorder %s20, 4
      %s30 = sphi 0, %s32
      %s33 = sphi 0, %s30
      %s34 = sphi 0, %s33
      %s50 = sphi 0, %s34
      %s54 = sphi 0, %s54
      %s56 = sphi 0, %s54
      %s57 = sphi 0, %s56
      %s71 = sphi 0, %s57
      %s77 = sphi 0, %s79
      %s80 = sphi 0, %s77
      %s81 = sphi 0, %s80
      %s97 = sphi 0, %s81
      %s103 = sphi 0, %s105
      %s106 = sphi 0, %s103
      %s107 = sphi 0, %s106
      %s123 = sphi 0, %s107
    $region4: #{tpu_custom_call.1} parent=1 // loop_header_branch
      %23 = sbr.rel (%p21) target = $region8
    $region5: #{tpu_custom_call.1} parent=1 // loop_body
      %s25 = ssub.s32 %s20, 1
      %s26 = ssub.s32 %s20, 2
      %s27 = sadd.s32 %s20, 1
      %s28 = ssub.s32 %s20, %s27
      %p29 = scmp.eq.s32.totalorder %s28, 0
      %s31 = sadd.s32 %s30, 1
      %s32 = scalar_select %p29, %s30, %s31
      %p35 = pneg %p29
      %p36 = scmp.eq.s32.totalorder %s20, 1
      %p37 = por %p35, %p36
      %p38 = scmp.ne.s32.totalorder %s30, %s33
      %p39 = scmp.eq.s32.totalorder %s20, 0
      %p40 = por %p38, %p39
      %p41 = scmp.ne.s32.totalorder %s30, %s33
      %p42 = scmp.eq.s32.totalorder %s25, 1
      %p43 = por %p41, %p42
      %p44 = scmp.ne.s32.totalorder %s33, %s34
      %p45 = scmp.eq.s32.totalorder %s25, 0
      %p46 = por %p44, %p45
      %p47 = scmp.ne.s32.totalorder %s33, %s34
      %p48 = scmp.eq.s32.totalorder %s26, 1
      %p49 = por %p47, %p48
      %p51 = scmp.ne.s32.totalorder %s34, %s50
      %p52 = scmp.eq.s32.totalorder %s26, 0
      %p53 = por %p51, %p52
      %s55 = sadd.s32 %s54, 1
      %p58 = scmp.eq.s32.totalorder %s20, 1
      %p59 = scmp.ne.s32.totalorder %s54, %s56
      %p60 = scmp.eq.s32.totalorder %s20, 0
      %p61 = por %p59, %p60
      %p62 = scmp.ne.s32.totalorder %s54, %s56
      %p63 = scmp.eq.s32.totalorder %s25, 1
      %p64 = por %p62, %p63
      %p65 = scmp.ne.s32.totalorder %s56, %s57
      %p66 = scmp.eq.s32.totalorder %s25, 0
      %p67 = por %p65, %p66
      %p68 = scmp.ne.s32.totalorder %s56, %s57
      %p69 = scmp.eq.s32.totalorder %s26, 1
      %p70 = por %p68, %p69
      %p72 = scmp.ne.s32.totalorder %s57, %s71
      %p73 = scmp.eq.s32.totalorder %s26, 0
      %p74 = por %p72, %p73
      %s75 = ssub.s32 %s20, %s27
      %p76 = scmp.eq.s32.totalorder %s75, 0
      %s78 = sadd.s32 %s77, 1
      %s79 = scalar_select %p76, %s77, %s78
      %p82 = pneg %p76
      %p83 = scmp.eq.s32.totalorder %s20, 1
      %p84 = por %p82, %p83
      %p85 = scmp.ne.s32.totalorder %s77, %s80
      %p86 = scmp.eq.s32.totalorder %s20, 0
      %p87 = por %p85, %p86
      %p88 = scmp.ne.s32.totalorder %s77, %s80
      %p89 = scmp.eq.s32.totalorder %s25, 1
      %p90 = por %p88, %p89
      %p91 = scmp.ne.s32.totalorder %s80, %s81
      %p92 = scmp.eq.s32.totalorder %s25, 0
      %p93 = por %p91, %p92
      %p94 = scmp.ne.s32.totalorder %s80, %s81
      %p95 = scmp.eq.s32.totalorder %s26, 1
      %p96 = por %p94, %p95
      %p98 = scmp.ne.s32.totalorder %s81, %s97
      %p99 = scmp.eq.s32.totalorder %s26, 0
      %p100 = por %p98, %p99
      %s101 = ssub.s32 %s20, %s27
      %p102 = scmp.eq.s32.totalorder %s101, 0
      %s104 = sadd.s32 %s103, 1
      %s105 = scalar_select %p102, %s103, %s104
      %p108 = pneg %p102
      %p109 = scmp.eq.s32.totalorder %s20, 1
      %p110 = por %p108, %p109
      %p111 = scmp.ne.s32.totalorder %s103, %s106
      %p112 = scmp.eq.s32.totalorder %s20, 0
      %p113 = por %p111, %p112
      %p114 = scmp.ne.s32.totalorder %s103, %s106
      %p115 = scmp.eq.s32.totalorder %s25, 1
      %p116 = por %p114, %p115
      %p117 = scmp.ne.s32.totalorder %s106, %s107
      %p118 = scmp.eq.s32.totalorder %s25, 0
      %p119 = por %p117, %p118
      %p120 = scmp.ne.s32.totalorder %s106, %s107
      %p121 = scmp.eq.s32.totalorder %s26, 1
      %p122 = por %p120, %p121
      %p124 = scmp.ne.s32.totalorder %s107, %s123
      %p125 = scmp.eq.s32.totalorder %s26, 0
      %p126 = por %p124, %p125
      %p127 = scmp.le.s32.totalorder 1, %s20
      %p128 = scmp.lt.s32.totalorder %s20, 3
      %p129 = pnand %p127, %p128
      %p130 = pneg %p129
      // Predicated region
      $region9: #{tpu_custom_call.1} parent=5 // pred_check
        _
      $region10: #{tpu_custom_call.1} parent=5 // pred_check_branch
        %132 = sbr.rel (%p129) target = $region12
      $region11: #{tpu_custom_call.1} parent=5 // pred_region
        %s133 = ssub.s32 %s20, 1
        // Predicated region
        $region13: #{tpu_custom_call.1} parent=11 // pred_check
          %p134 = pneg %p67
        $region14: #{tpu_custom_call.1} parent=11 // pred_check_branch
          %136 = sbr.rel (%p134) target = $region16
        $region15: #{tpu_custom_call.1} parent=11 // pred_region
          %138 = vsyncadd [#allocation6], 0
          %s139 = sshll.u32 %s1, 4
          %s140 = int_to_ptr.hbm [resolvable:$true] %s139
          %s141 = sshll.u32 [#allocation5], 4
          %s142 = int_to_ptr.vmem [resolvable:$true] %s141
          %147 = dma.hbm_to_vmem [thread:$0]  %s140, 1024, %s142, [#allocation6], 64, 64, 4
        $region16: #{tpu_custom_call.1} parent=11 // pred_fallthru
          _
      $region12: #{tpu_custom_call.1} parent=5 // pred_fallthru
        _
      %p148 = scmp.lt.s32.totalorder %s20, 2
      // Predicated region
      $region17: #{tpu_custom_call.1} parent=5 // pred_check
        %p149 = pneg %p148
      $region18: #{tpu_custom_call.1} parent=5 // pred_check_branch
        %151 = sbr.rel (%p149) target = $region20
      $region19: #{tpu_custom_call.1} parent=5 // pred_region
        // Predicated region
        $region21: #{tpu_custom_call.1} parent=19 // pred_check
          %p152 = pneg %p40
        $region22: #{tpu_custom_call.1} parent=19 // pred_check_branch
          %154 = sbr.rel (%p152) target = $region24
        $region23: #{tpu_custom_call.1} parent=19 // pred_region
          %s155 = sand.u32 %s30, 1
          %s156 = scalar_lea.sflag [#allocation3], %s155
          %s157 = sand.u32 %s30, 1
          %s158 = smul.addr %s157, 128
          %s159 = scalar_lea.vmem [#allocation2], %s158
          %s160 = smul.u32 32, %s20
          %162 = vsyncadd %s156, 0
          %s163 = smul.addr %s160, 4
          %s164 = scalar_lea.hbm %s0, %s163
          %s165 = sshll.u32 %s164, 4
          %s166 = int_to_ptr.hbm [resolvable:$true] %s165
          %s167 = sshll.u32 %s159, 4
          %s168 = int_to_ptr.vmem [resolvable:$true] %s167
          %173 = dma.hbm_to_vmem [thread:$0]  %s166, 2048, %s168, %s156, 64, 64, 4
        $region24: #{tpu_custom_call.1} parent=19 // pred_fallthru
          _
      $region20: #{tpu_custom_call.1} parent=5 // pred_fallthru
        _
      %p174 = scmp.le.s32.totalorder 1, %s20
      %p175 = scmp.lt.s32.totalorder %s20, 3
      %p176 = pnand %p174, %p175
      %p177 = pneg %p176
      // Predicated region
      $region25: #{tpu_custom_call.1} parent=5 // pred_check
        _
      $region26: #{tpu_custom_call.1} parent=5 // pred_check_branch
        %179 = sbr.rel (%p176) target = $region28
      $region27: #{tpu_custom_call.1} parent=5 // pred_region
        %s180 = ssub.s32 %s20, 1
        %s181 = sand.u32 %s33, 1
        %s182 = scalar_lea.sflag [#allocation3], %s181
        %s183 = sand.u32 %s33, 1
        %s184 = smul.addr %s183, 128
        %s185 = scalar_lea.vmem [#allocation2], %s184
        // Predicated region
        $region29: #{tpu_custom_call.1} parent=27 // pred_check
          %p186 = pneg %p46
        $region30: #{tpu_custom_call.1} parent=27 // pred_check_branch
          %188 = sbr.rel (%p186) target = $region32
        $region31: #{tpu_custom_call.1} parent=27 // pred_region
          %190 = dma.done %s182, 2048
        $region32: #{tpu_custom_call.1} parent=27 // pred_fallthru
          _
        // Predicated region
        $region33: #{tpu_custom_call.1} parent=27 // pred_check
          %p191 = pneg %p67
        $region34: #{tpu_custom_call.1} parent=27 // pred_check_branch
          %193 = sbr.rel (%p191) target = $region36
        $region35: #{tpu_custom_call.1} parent=27 // pred_region
          %195 = dma.done [#allocation6], 1024
        $region36: #{tpu_custom_call.1} parent=27 // pred_fallthru
          _
        %s196 = sand.u32 %s33, 1
        %s197 = scalar_lea.sflag [#allocation3], %s196
        %s198 = sand.u32 %s33, 1
        %s199 = smul.addr %s198, 128
        %s200 = scalar_lea.vmem [#allocation2], %s199
        %p201 = pneg %p46
        %p202 = pneg %p43
        %p203 = pneg %p67
        %p204 = pneg %p64
        %p205 = pneg %p93
        %p206 = pneg %p90
        %s207 = sand.u32 %s80, 1
        %s208 = scalar_lea.sflag [#allocation4], %s207
        %s209 = sand.u32 %s80, 1
        %s210 = smul.addr %s209, 256
        %s211 = scalar_lea.vmem [#allocation7], %s210
        %p212 = pneg %p119
        %p213 = pneg %p116
        %s214 = sand.u32 %s106, 1
        %s215 = scalar_lea.sflag [#allocation9], %s214
        %s216 = sand.u32 %s106, 1
        %s217 = smul.addr %s216, 8
        %s218 = scalar_lea.vmem [#allocation8], %s217
        %s219 = smul.u32 32, %s25
        %s220 = smul.u32 32, %s25
        %v221 = vld [vmem:[%s185] sm:$0xf]
        %v222 = vld [vmem:[%s185 + $0x4] sm:$0xf]
        %v223 = vld [vmem:[%s185 + $0x8] sm:$0xf]
        %v224 = vld [vmem:[%s185 + $0xc] sm:$0xf]
        %v225 = vld [vmem:[%s185 + $0x10] sm:$0xf]
        %v226 = vld [vmem:[%s185 + $0x14] sm:$0xf]
        %v227 = vld [vmem:[%s185 + $0x18] sm:$0xf]
        %v228 = vld [vmem:[%s185 + $0x1c] sm:$0xf]
        %v229 = vld [vmem:[%s185 + $0x20] sm:$0xf]
        %v230 = vld [vmem:[%s185 + $0x24] sm:$0xf]
        %v231 = vld [vmem:[%s185 + $0x28] sm:$0xf]
        %v232 = vld [vmem:[%s185 + $0x2c] sm:$0xf]
        %v233 = vld [vmem:[%s185 + $0x30] sm:$0xf]
        %v234 = vld [vmem:[%s185 + $0x34] sm:$0xf]
        %v235 = vld [vmem:[%s185 + $0x38] sm:$0xf]
        %v236 = vld [vmem:[%s185 + $0x3c] sm:$0xf]
        %v237 = vld [vmem:[%s185 + $0x40] sm:$0xf]
        %v238 = vld [vmem:[%s185 + $0x44] sm:$0xf]
        %v239 = vld [vmem:[%s185 + $0x48] sm:$0xf]
        %v240 = vld [vmem:[%s185 + $0x4c] sm:$0xf]
        %v241 = vld [vmem:[%s185 + $0x50] sm:$0xf]
        %v242 = vld [vmem:[%s185 + $0x54] sm:$0xf]
        %v243 = vld [vmem:[%s185 + $0x58] sm:$0xf]
        %v244 = vld [vmem:[%s185 + $0x5c] sm:$0xf]
        %v245 = vld [vmem:[%s185 + $0x60] sm:$0xf]
        %v246 = vld [vmem:[%s185 + $0x64] sm:$0xf]
        %v247 = vld [vmem:[%s185 + $0x68] sm:$0xf]
        %v248 = vld [vmem:[%s185 + $0x6c] sm:$0xf]
        %v249 = vld [vmem:[%s185 + $0x70] sm:$0xf]
        %v250 = vld [vmem:[%s185 + $0x74] sm:$0xf]
        %v251 = vld [vmem:[%s185 + $0x78] sm:$0xf]
        %v252 = vld [vmem:[%s185 + $0x7c] sm:$0xf]
        %v253 = vld [vmem:[#allocation5] sm:$0xf]
        %v254 = vld [vmem:[#allocation5 + $0x4] sm:$0xf]
        %v255 = vld [vmem:[#allocation5 + $0x8] sm:$0xf]
        %v256 = vld [vmem:[#allocation5 + $0xc] sm:$0xf]
        %v257 = vld [vmem:[#allocation5 + $0x10] sm:$0xf]
        %v258 = vld [vmem:[#allocation5 + $0x14] sm:$0xf]
        %v259 = vld [vmem:[#allocation5 + $0x18] sm:$0xf]
        %v260 = vld [vmem:[#allocation5 + $0x1c] sm:$0xf]
        %v261 = vld [vmem:[#allocation5 + $0x20] sm:$0xf]
        %v262 = vld [vmem:[#allocation5 + $0x24] sm:$0xf]
        %v263 = vld [vmem:[#allocation5 + $0x28] sm:$0xf]
        %v264 = vld [vmem:[#allocation5 + $0x2c] sm:$0xf]
        %v265 = vld [vmem:[#allocation5 + $0x30] sm:$0xf]
        %v266 = vld [vmem:[#allocation5 + $0x34] sm:$0xf]
        %v267 = vld [vmem:[#allocation5 + $0x38] sm:$0xf]
        %v268 = vld [vmem:[#allocation5 + $0x3c] sm:$0xf]
        %v301 = vunpack.c.l.b16 %v221
        %v302 = vunpack.c.l.b16 %v222
        %v303 = vunpack.c.l.b16 %v223
        %v304 = vunpack.c.l.b16 %v224
        %v305 = vunpack.c.l.b16 %v225
        %v306 = vunpack.c.l.b16 %v226
        %v307 = vunpack.c.l.b16 %v227
        %v308 = vunpack.c.l.b16 %v228
        %v309 = vunpack.c.l.b16 %v229
        %v310 = vunpack.c.l.b16 %v230
        %v311 = vunpack.c.l.b16 %v231
        %v312 = vunpack.c.l.b16 %v232
        %v313 = vunpack.c.l.b16 %v233
        %v314 = vunpack.c.l.b16 %v234
        %v315 = vunpack.c.l.b16 %v235
        %v316 = vunpack.c.l.b16 %v236
        %v317 = vunpack.c.l.b16 %v237
        %v318 = vunpack.c.l.b16 %v238
        %v319 = vunpack.c.l.b16 %v239
        %v320 = vunpack.c.l.b16 %v240
        %v321 = vunpack.c.l.b16 %v241
        %v322 = vunpack.c.l.b16 %v242
        %v323 = vunpack.c.l.b16 %v243
        %v324 = vunpack.c.l.b16 %v244
        %v325 = vunpack.c.l.b16 %v245
        %v326 = vunpack.c.l.b16 %v246
        %v327 = vunpack.c.l.b16 %v247
        %v328 = vunpack.c.l.b16 %v248
        %v329 = vunpack.c.l.b16 %v249
        %v330 = vunpack.c.l.b16 %v250
        %v331 = vunpack.c.l.b16 %v251
        %v332 = vunpack.c.l.b16 %v252
        %v333 = vpack.c.b16 %v302, %v301
        %v334 = vpack.c.b16 %v304, %v303
        %v335 = vpack.c.b16 %v306, %v305
        %v336 = vpack.c.b16 %v308, %v307
        %v337 = vpack.c.b16 %v310, %v309
        %v338 = vpack.c.b16 %v312, %v311
        %v339 = vpack.c.b16 %v314, %v313
        %v340 = vpack.c.b16 %v316, %v315
        %v341 = vpack.c.b16 %v318, %v317
        %v342 = vpack.c.b16 %v320, %v319
        %v343 = vpack.c.b16 %v322, %v321
        %v344 = vpack.c.b16 %v324, %v323
        %v345 = vpack.c.b16 %v326, %v325
        %v346 = vpack.c.b16 %v328, %v327
        %v347 = vpack.c.b16 %v330, %v329
        %v348 = vpack.c.b16 %v332, %v331
        %v381 = vunpack.c.l.b16 %v253
        %v382 = vunpack.c.l.b16 %v254
        %v383 = vunpack.c.l.b16 %v255
        %v384 = vunpack.c.l.b16 %v256
        %v385 = vunpack.c.l.b16 %v257
        %v386 = vunpack.c.l.b16 %v258
        %v387 = vunpack.c.l.b16 %v259
        %v388 = vunpack.c.l.b16 %v260
        %v389 = vunpack.c.l.b16 %v261
        %v390 = vunpack.c.l.b16 %v262
        %v391 = vunpack.c.l.b16 %v263
        %v392 = vunpack.c.l.b16 %v264
        %v393 = vunpack.c.l.b16 %v265
        %v394 = vunpack.c.l.b16 %v266
        %v395 = vunpack.c.l.b16 %v267
        %v396 = vunpack.c.l.b16 %v268
        %v397 = vpack.c.b16 %v382, %v381
        %v398 = vpack.c.b16 %v384, %v383
        %v399 = vpack.c.b16 %v386, %v385
        %v400 = vpack.c.b16 %v388, %v387
        %v401 = vpack.c.b16 %v390, %v389
        %v402 = vpack.c.b16 %v392, %v391
        %v403 = vpack.c.b16 %v394, %v393
        %v404 = vpack.c.b16 %v396, %v395
        %413 = vmatpush.bf16.msra.mxu0 %v404
        %414 = vmatpush.bf16.msra.mxu0 %v403
        %415 = vmatpush.bf16.msra.mxu0 %v402
        %416 = vmatpush.bf16.msra.mxu0 %v401
        %417 = vmatpush.bf16.msra.mxu0 %v400
        %418 = vmatpush.bf16.msra.mxu0 %v399
        %419 = vmatpush.bf16.msra.mxu0 %v398
        %420 = vmatpush.bf16.msra.mxu0 %v397
        %421 = vmatmul.bf16.gmra.mxu0 %v333
        %v422 = vpop.f32.mrf.mxu0
        %v423 = vadd.f32 0.0, %v422
        %v424 = vpop.f32.mrf.mxu0
        %v425 = vadd.f32 0.0, %v424
        %426 = vmatmul.bf16.gmra.mxu0 %v334
        %v427 = vpop.f32.mrf.mxu0
        %v428 = vadd.f32 0.0, %v427
        %v429 = vpop.f32.mrf.mxu0
        %v430 = vadd.f32 0.0, %v429
        %431 = vmatmul.bf16.gmra.mxu0 %v335
        %v432 = vpop.f32.mrf.mxu0
        %v433 = vadd.f32 0.0, %v432
        %v434 = vpop.f32.mrf.mxu0
        %v435 = vadd.f32 0.0, %v434
        %436 = vmatmul.bf16.gmra.mxu0 %v336
        %v437 = vpop.f32.mrf.mxu0
        %v438 = vadd.f32 0.0, %v437
        %v439 = vpop.f32.mrf.mxu0
        %v440 = vadd.f32 0.0, %v439
        %441 = vmatmul.bf16.gmra.mxu0 %v337
        %v442 = vpop.f32.mrf.mxu0
        %v443 = vadd.f32 0.0, %v442
        %v444 = vpop.f32.mrf.mxu0
        %v445 = vadd.f32 0.0, %v444
        %446 = vmatmul.bf16.gmra.mxu0 %v338
        %v447 = vpop.f32.mrf.mxu0
        %v448 = vadd.f32 0.0, %v447
        %v449 = vpop.f32.mrf.mxu0
        %v450 = vadd.f32 0.0, %v449
        %451 = vmatmul.bf16.gmra.mxu0 %v339
        %v452 = vpop.f32.mrf.mxu0
        %v453 = vadd.f32 0.0, %v452
        %v454 = vpop.f32.mrf.mxu0
        %v455 = vadd.f32 0.0, %v454
        %456 = vmatmul.bf16.gmra.mxu0 %v340
        %v457 = vpop.f32.mrf.mxu0
        %v458 = vadd.f32 0.0, %v457
        %v459 = vpop.f32.mrf.mxu0
        %v460 = vadd.f32 0.0, %v459
        %461 = vmatmul.bf16.gmra.mxu0 %v341
        %v462 = vpop.f32.mrf.mxu0
        %v463 = vadd.f32 0.0, %v462
        %v464 = vpop.f32.mrf.mxu0
        %v465 = vadd.f32 0.0, %v464
        %466 = vmatmul.bf16.gmra.mxu0 %v342
        %v467 = vpop.f32.mrf.mxu0
        %v468 = vadd.f32 0.0, %v467
        %v469 = vpop.f32.mrf.mxu0
        %v470 = vadd.f32 0.0, %v469
        %471 = vmatmul.bf16.gmra.mxu0 %v343
        %v472 = vpop.f32.mrf.mxu0
        %v473 = vadd.f32 0.0, %v472
        %v474 = vpop.f32.mrf.mxu0
        %v475 = vadd.f32 0.0, %v474
        %476 = vmatmul.bf16.gmra.mxu0 %v344
        %v477 = vpop.f32.mrf.mxu0
        %v478 = vadd.f32 0.0, %v477
        %v479 = vpop.f32.mrf.mxu0
        %v480 = vadd.f32 0.0, %v479
        %481 = vmatmul.bf16.gmra.mxu0 %v345
        %v482 = vpop.f32.mrf.mxu0
        %v483 = vadd.f32 0.0, %v482
        %v484 = vpop.f32.mrf.mxu0
        %v485 = vadd.f32 0.0, %v484
        %486 = vmatmul.bf16.gmra.mxu0 %v346
        %v487 = vpop.f32.mrf.mxu0
        %v488 = vadd.f32 0.0, %v487
        %v489 = vpop.f32.mrf.mxu0
        %v490 = vadd.f32 0.0, %v489
        %491 = vmatmul.bf16.gmra.mxu0 %v347
        %v492 = vpop.f32.mrf.mxu0
        %v493 = vadd.f32 0.0, %v492
        %v494 = vpop.f32.mrf.mxu0
        %v495 = vadd.f32 0.0, %v494
        %496 = vmatmul.bf16.gmra.mxu0 %v348
        %v497 = vpop.f32.mrf.mxu0
        %v498 = vadd.f32 0.0, %v497
        %v499 = vpop.f32.mrf.mxu0
        %v500 = vadd.f32 0.0, %v499
        %501 = vdwg.mxu0
        %502 = vst [vmem:[%s211] sm:$0xff] %v423
        %503 = vst [vmem:[%s211 + $0x8] sm:$0xff] %v425
        %504 = vst [vmem:[%s211 + $0x10] sm:$0xff] %v428
        %505 = vst [vmem:[%s211 + $0x18] sm:$0xff] %v430
        %506 = vst [vmem:[%s211 + $0x20] sm:$0xff] %v433
        %507 = vst [vmem:[%s211 + $0x28] sm:$0xff] %v435
        %508 = vst [vmem:[%s211 + $0x30] sm:$0xff] %v438
        %509 = vst [vmem:[%s211 + $0x38] sm:$0xff] %v440
        %510 = vst [vmem:[%s211 + $0x40] sm:$0xff] %v443
        %511 = vst [vmem:[%s211 + $0x48] sm:$0xff] %v445
        %512 = vst [vmem:[%s211 + $0x50] sm:$0xff] %v448
        %513 = vst [vmem:[%s211 + $0x58] sm:$0xff] %v450
        %514 = vst [vmem:[%s211 + $0x60] sm:$0xff] %v453
        %515 = vst [vmem:[%s211 + $0x68] sm:$0xff] %v455
        %516 = vst [vmem:[%s211 + $0x70] sm:$0xff] %v458
        %517 = vst [vmem:[%s211 + $0x78] sm:$0xff] %v460
        %518 = vst [vmem:[%s211 + $0x80] sm:$0xff] %v463
        %519 = vst [vmem:[%s211 + $0x88] sm:$0xff] %v465
        %520 = vst [vmem:[%s211 + $0x90] sm:$0xff] %v468
        %521 = vst [vmem:[%s211 + $0x98] sm:$0xff] %v470
        %522 = vst [vmem:[%s211 + $0xa0] sm:$0xff] %v473
        %523 = vst [vmem:[%s211 + $0xa8] sm:$0xff] %v475
        %524 = vst [vmem:[%s211 + $0xb0] sm:$0xff] %v478
        %525 = vst [vmem:[%s211 + $0xb8] sm:$0xff] %v480
        %526 = vst [vmem:[%s211 + $0xc0] sm:$0xff] %v483
        %527 = vst [vmem:[%s211 + $0xc8] sm:$0xff] %v485
        %528 = vst [vmem:[%s211 + $0xd0] sm:$0xff] %v488
        %529 = vst [vmem:[%s211 + $0xd8] sm:$0xff] %v490
        %530 = vst [vmem:[%s211 + $0xe0] sm:$0xff] %v493
        %531 = vst [vmem:[%s211 + $0xe8] sm:$0xff] %v495
        %532 = vst [vmem:[%s211 + $0xf0] sm:$0xff] %v498
        %533 = vst [vmem:[%s211 + $0xf8] sm:$0xff] %v500
        %v534 = vadd.f32 %v423, %v425
        %v535 = vadd.f32 %v534, %v428
        %v536 = vadd.f32 %v535, %v430
        %v537 = vadd.f32 %v536, %v433
        %v538 = vadd.f32 %v537, %v435
        %v539 = vadd.f32 %v538, %v438
        %v540 = vadd.f32 %v539, %v440
        %v541 = vadd.f32 %v540, %v443
        %v542 = vadd.f32 %v541, %v445
        %v543 = vadd.f32 %v542, %v448
        %v544 = vadd.f32 %v543, %v450
        %v545 = vadd.f32 %v544, %v453
        %v546 = vadd.f32 %v545, %v455
        %v547 = vadd.f32 %v546, %v458
        %v548 = vadd.f32 %v547, %v460
        %v549 = vadd.f32 %v548, %v463
        %v550 = vadd.f32 %v549, %v465
        %v551 = vadd.f32 %v550, %v468
        %v552 = vadd.f32 %v551, %v470
        %v553 = vadd.f32 %v552, %v473
        %v554 = vadd.f32 %v553, %v475
        %v555 = vadd.f32 %v554, %v478
        %v556 = vadd.f32 %v555, %v480
        %v557 = vadd.f32 %v556, %v483
        %v558 = vadd.f32 %v557, %v485
        %v559 = vadd.f32 %v558, %v488
        %v560 = vadd.f32 %v559, %v490
        %v561 = vadd.f32 %v560, %v493
        %v562 = vadd.f32 %v561, %v495
        %v563 = vadd.f32 %v562, %v498
        %v564 = vadd.f32 %v563, %v500
        %v565 = vrot.slane %v564, 4
        %v566 = vadd.f32 %v564, %v565
        %v567 = vrot.slane %v566, 2
        %v568 = vadd.f32 %v566, %v567
        %v569 = vrot.slane %v568, 1
        %v570 = vadd.f32 %v568, %v569
        %v571 = vmul.f32 %v423, %v423
        %v572 = vmul.f32 %v425, %v425
        %v573 = vmul.f32 %v428, %v428
        %v574 = vmul.f32 %v430, %v430
        %v575 = vmul.f32 %v433, %v433
        %v576 = vmul.f32 %v435, %v435
        %v577 = vmul.f32 %v438, %v438
        %v578 = vmul.f32 %v440, %v440
        %v579 = vmul.f32 %v443, %v443
        %v580 = vmul.f32 %v445, %v445
        %v581 = vmul.f32 %v448, %v448
        %v582 = vmul.f32 %v450, %v450
        %v583 = vmul.f32 %v453, %v453
        %v584 = vmul.f32 %v455, %v455
        %v585 = vmul.f32 %v458, %v458
        %v586 = vmul.f32 %v460, %v460
        %v587 = vmul.f32 %v463, %v463
        %v588 = vmul.f32 %v465, %v465
        %v589 = vmul.f32 %v468, %v468
        %v590 = vmul.f32 %v470, %v470
        %v591 = vmul.f32 %v473, %v473
        %v592 = vmul.f32 %v475, %v475
        %v593 = vmul.f32 %v478, %v478
        %v594 = vmul.f32 %v480, %v480
        %v595 = vmul.f32 %v483, %v483
        %v596 = vmul.f32 %v485, %v485
        %v597 = vmul.f32 %v488, %v488
        %v598 = vmul.f32 %v490, %v490
        %v599 = vmul.f32 %v493, %v493
        %v600 = vmul.f32 %v495, %v495
        %v601 = vmul.f32 %v498, %v498
        %v602 = vmul.f32 %v500, %v500
        %v603 = vadd.f32 %v571, %v572
        %v604 = vadd.f32 %v603, %v573
        %v605 = vadd.f32 %v604, %v574
        %v606 = vadd.f32 %v605, %v575
        %v607 = vadd.f32 %v606, %v576
        %v608 = vadd.f32 %v607, %v577
        %v609 = vadd.f32 %v608, %v578
        %v610 = vadd.f32 %v609, %v579
        %v611 = vadd.f32 %v610, %v580
        %v612 = vadd.f32 %v611, %v581
        %v613 = vadd.f32 %v612, %v582
        %v614 = vadd.f32 %v613, %v583
        %v615 = vadd.f32 %v614, %v584
        %v616 = vadd.f32 %v615, %v585
        %v617 = vadd.f32 %v616, %v586
        %v618 = vadd.f32 %v617, %v587
        %v619 = vadd.f32 %v618, %v588
        %v620 = vadd.f32 %v619, %v589
        %v621 = vadd.f32 %v620, %v590
        %v622 = vadd.f32 %v621, %v591
        %v623 = vadd.f32 %v622, %v592
        %v624 = vadd.f32 %v623, %v593
        %v625 = vadd.f32 %v624, %v594
        %v626 = vadd.f32 %v625, %v595
        %v627 = vadd.f32 %v626, %v596
        %v628 = vadd.f32 %v627, %v597
        %v629 = vadd.f32 %v628, %v598
        %v630 = vadd.f32 %v629, %v599
        %v631 = vadd.f32 %v630, %v600
        %v632 = vadd.f32 %v631, %v601
        %v633 = vadd.f32 %v632, %v602
        %v634 = vrot.slane %v633, 4
        %v635 = vadd.f32 %v633, %v634
        %v636 = vrot.slane %v635, 2
        %v637 = vadd.f32 %v635, %v636
        %v638 = vrot.slane %v637, 1
        %v639 = vadd.f32 %v637, %v638
        %vm640 = vcmask 1040384
        %v641 = vsel %vm640, %v570, %v639
        %vm642 = vcmask 1041408
        %v643 = vsel %vm642, %v641, 0.0
        %644 = vst [vmem:[%s218] sm:$0xff] %v643
        %s645 = sand.u32 %s80, 1
        %s646 = scalar_lea.sflag [#allocation4], %s645
        %s647 = sand.u32 %s80, 1
        %s648 = smul.addr %s647, 256
        %s649 = scalar_lea.vmem [#allocation7], %s648
        %s650 = sand.u32 %s106, 1
        %s651 = scalar_lea.sflag [#allocation9], %s650
        %s652 = sand.u32 %s106, 1
        %s653 = smul.addr %s652, 8
        %s654 = scalar_lea.vmem [#allocation8], %s653
        // Predicated region
        $region37: #{tpu_custom_call.1} parent=27 // pred_check
          %p655 = pneg %p90
        $region38: #{tpu_custom_call.1} parent=27 // pred_check_branch
          %657 = sbr.rel (%p655) target = $region40
        $region39: #{tpu_custom_call.1} parent=27 // pred_region
          %s658 = smul.u32 32, %s25
          %660 = vsyncadd %s646, 0
          %s661 = smul.addr %s658, 8
          %s662 = scalar_lea.hbm %s2, %s661
          %s663 = sshll.u32 %s649, 4
          %s664 = int_to_ptr.vmem [resolvable:$true] %s663
          %s665 = sshll.u32 %s662, 4
          %s666 = int_to_ptr.hbm [resolvable:$true] %s665
          %671 = dma.vmem_to_hbm [thread:$0]  %s664, 4096, %s666, %s646, 128, 128, 8
        $region40: #{tpu_custom_call.1} parent=27 // pred_fallthru
          _
        // Predicated region
        $region41: #{tpu_custom_call.1} parent=27 // pred_check
          %p672 = pneg %p116
        $region42: #{tpu_custom_call.1} parent=27 // pred_check_branch
          %674 = sbr.rel (%p672) target = $region44
        $region43: #{tpu_custom_call.1} parent=27 // pred_region
          %676 = vsyncadd %s651, 0
          %s677 = smul.addr %s25, 8
          %s678 = scalar_lea.hbm %s3, %s677
          %s680 = sshll.u32 %s654, 4
          %s681 = int_to_ptr.vmem [resolvable:$true] %s680
          %s682 = sshll.u32 %s678, 4
          %s683 = int_to_ptr.hbm [resolvable:$true] %s682
          %685 = dma.vmem_to_hbm [thread:$0]  %s681, 128, %s683, %s651
        $region44: #{tpu_custom_call.1} parent=27 // pred_fallthru
          _
      $region28: #{tpu_custom_call.1} parent=5 // pred_fallthru
        _
      %p686 = scmp.le.s32.totalorder 2, %s20
      // Predicated region
      $region45: #{tpu_custom_call.1} parent=5 // pred_check
        %p687 = pneg %p686
      $region46: #{tpu_custom_call.1} parent=5 // pred_check_branch
        %689 = sbr.rel (%p687) target = $region48
      $region47: #{tpu_custom_call.1} parent=5 // pred_region
        %s690 = ssub.s32 %s20, 2
        // Predicated region
        $region49: #{tpu_custom_call.1} parent=47 // pred_check
          %p691 = pneg %p96
        $region50: #{tpu_custom_call.1} parent=47 // pred_check_branch
          %693 = sbr.rel (%p691) target = $region52
        $region51: #{tpu_custom_call.1} parent=47 // pred_region
          %s694 = sand.u32 %s81, 1
          %s695 = scalar_lea.sflag [#allocation4], %s694
          %s696 = sand.u32 %s81, 1
          %s697 = smul.addr %s696, 256
          %s698 = scalar_lea.vmem [#allocation7], %s697
          %700 = dma.done %s695, 4096
        $region52: #{tpu_custom_call.1} parent=47 // pred_fallthru
          _
        // Predicated region
        $region53: #{tpu_custom_call.1} parent=47 // pred_check
          %p701 = pneg %p122
        $region54: #{tpu_custom_call.1} parent=47 // pred_check_branch
          %703 = sbr.rel (%p701) target = $region56
        $region55: #{tpu_custom_call.1} parent=47 // pred_region
          %s704 = sand.u32 %s107, 1
          %s705 = scalar_lea.sflag [#allocation9], %s704
          %s706 = sand.u32 %s107, 1
          %s707 = smul.addr %s706, 8
          %s708 = scalar_lea.vmem [#allocation8], %s707
          %710 = dma.done %s705, 128
        $region56: #{tpu_custom_call.1} parent=47 // pred_fallthru
          _
      $region48: #{tpu_custom_call.1} parent=5 // pred_fallthru
        _
    $region6: #{tpu_custom_call.1} parent=1 // loop_footer
      %s24 = sadd.s32 1, %s20
    $region7: #{tpu_custom_call.1} parent=1 // loop_footer_branch
      %19 = sbr.rel target = $region3
    $region8: #{tpu_custom_call.1} parent=1 // loop_exit
      _
    %711 = vsyncpa [#allocation3], 1
    %s712 = scalar_lea.sflag [#allocation3], 1
    %713 = vsyncpa %s712, 1
    %714 = vsyncpa [#allocation6], 1
    %715 = vsyncpa [#allocation4], 1
    %s716 = scalar_lea.sflag [#allocation4], 1
    %717 = vsyncpa %s716, 1
    %718 = vsyncpa [#allocation9], 1
    %s719 = scalar_lea.sflag [#allocation9], 1
    %720 = vsyncpa %s719, 1

</llo_original>
